<compile_context>
chip_gen: v7x
topology: tpu7x:2x2x1
jax: 0.10.0
libtpu: 0.0.40
codegen_flags: <defaults>
</compile_context>

<pallas_src>
import jax
import jax.numpy as jnp
from jax import lax
from jax.experimental import pallas as pl
from jax.experimental.pallas import tpu as pltpu


def _round_up(x: int, m: int) -> int:
    return (x + m - 1) // m * m


def _coral_kernel(zi_ref, zj_ref, sgn_ref, cl_ref, cr_ref, out_ref, acc_ref):
    k = pl.program_id(2)

    @pl.when(k == 0)
    def _init():
        acc_ref[...] = jnp.zeros_like(acc_ref)

    # One fused, signed MXU contraction over the sample-chunk axis (contract axis 0, so
    # no explicit transpose):   acc += Zi^T @ (sgn * Zj)  ==  [S^T S - T^T T]_(i,j tile)
    dn = (((0,), (0,)), ((), ()))
    wj = zj_ref[...] * sgn_ref[...]          # +1 source rows, -1 target rows, 0 padding
    acc_ref[...] += lax.dot_general(
        zi_ref[...], wj, dn, preferred_element_type=jnp.float32)

    @pl.when(k == pl.num_programs(2) - 1)
    def _finalize():
        # Rank-1 mean corrections (Gram identity), both fused into one tiny outer product:
        #   corr = -(1/n_s) * s_i (x) s_j  +  (1/n_t) * t_i (x) t_j      (kept in f32)
        corr = lax.dot_general(
            cl_ref[...], cr_ref[...], dn, preferred_element_type=jnp.float32)
        diff = acc_ref[...] + corr           # == (xm^T xm - xmt^T xmt) tile, exactly
        partial = jnp.sum(diff * diff)       # per-tile contribution to sum((xc-xct)^2)
        # Lane-dense (8, 128) write of the per-tile scalar (unmasked vst).
        out_ref[...] = jnp.full(out_ref.shape, partial, dtype=jnp.float32)


def coral_loss(source, target, *, tile_d=None, sample_chunk=512):
    """CORAL loss; source (n_s, d), target (n_t, d) -> scalar float32."""
    assert source.ndim == 2 and target.ndim == 2, "CORAL expects 2-D (samples, features)"
    assert source.shape[1] == target.shape[1], "feature dims must match"
    n_s, d = source.shape
    n_t = target.shape[0]
    n = n_s + n_t

    # ---- feature-dim tiling (128-aligned; 256 matches v6e/v7x MXU, fine on v5e) ----
    if tile_d is None:
        tile_d = 256 if d >= 256 else (128 if d >= 128 else d)
    d_pad = _round_up(d, tile_d) if d >= 128 else d      # tiny d: one full-width tile
    n_di = d_pad // tile_d

    # ---- sample-axis chunking (multiple of 8 sublanes) ----
    k_blk = _round_up(min(int(sample_chunk), _round_up(n, 8)), 8)
    n_pad = _round_up(n, k_blk)
    nk = n_pad // k_blk

    # ---- cheap single-pass host-side preprocessing ----
    z = jnp.concatenate([source, target], axis=0)
    zdt = z.dtype
    if (n_pad, d_pad) != (n, d):
        z = jnp.pad(z, ((0, n_pad - n), (0, d_pad - d)))   # zero rows/cols contribute 0

    sgn = jnp.concatenate(
        [jnp.ones((n_s, 1), zdt),
         -jnp.ones((n_t, 1), zdt),
         jnp.zeros((n_pad - n, 1), zdt)], axis=0)

    # Column sums (f32) for the rank-1 mean corrections, pre-scaled & stacked so the
    # kernel applies both corrections with a single (2, td) x (2, td) outer product.
    cs_src = jnp.sum(source, axis=0, dtype=jnp.float32).reshape(1, d)
    cs_tgt = jnp.sum(target, axis=0, dtype=jnp.float32).reshape(1, d)
    if d_pad != d:
        pad = ((0, 0), (0, d_pad - d))
        cs_src = jnp.pad(cs_src, pad)
        cs_tgt = jnp.pad(cs_tgt, pad)
    corr_l = jnp.concatenate([cs_src * (-1.0 / n_s), cs_tgt * (1.0 / n_t)], axis=0)
    corr_r = jnp.concatenate([cs_src, cs_tgt], axis=0)

    itemsize = jnp.dtype(zdt).itemsize
    cost = pl.CostEstimate(
        flops=int(2 * n_di * n_di * n_pad * tile_d * tile_d),
        transcendentals=0,
        bytes_accessed=int(2 * n_di * n_di * n_pad * tile_d * itemsize
                           + n_di * n_di * 8 * 128 * 4),
    )

    partials = pl.pallas_call(
        _coral_kernel,
        out_shape=jax.ShapeDtypeStruct((n_di * 8, n_di * 128), jnp.float32),
        grid_spec=pltpu.PrefetchScalarGridSpec(
            num_scalar_prefetch=0,
            grid=(n_di, n_di, nk),
            in_specs=[
                pl.BlockSpec((k_blk, tile_d), lambda i, j, k: (k, i)),   # Z, i-side cols
                pl.BlockSpec((k_blk, tile_d), lambda i, j, k: (k, j)),   # Z, j-side cols
                pl.BlockSpec((k_blk, 1), lambda i, j, k: (k, 0)),        # row sign
                pl.BlockSpec((2, tile_d), lambda i, j, k: (0, i)),       # corr left (i)
                pl.BlockSpec((2, tile_d), lambda i, j, k: (0, j)),       # corr right (j)
            ],
            out_specs=pl.BlockSpec((8, 128), lambda i, j, k: (i, j)),
            scratch_shapes=[pltpu.VMEM((tile_d, tile_d), jnp.float32)],
        ),
        compiler_params=pltpu.CompilerParams(
            dimension_semantics=("parallel", "parallel", "arbitrary")),
        cost_estimate=cost,
    )(z, z, sgn, corr_l, corr_r)

    total = jnp.sum(partials[::8, ::128])
    # torch: mean over (d, d) -> / d^2, then / (4 d^2)   (both scalings, as in the module)
    return total / jnp.float32(d * d) / jnp.float32(4 * d * d)


def _coral_ref(source, target):
    """Pure-JAX reference mirroring the PyTorch forward exactly (f32, high precision)."""
    s = source.astype(jnp.float32)
    t = target.astype(jnp.float32)
    d = s.shape[1]
    hp = lax.Precision.HIGHEST
    xm = jnp.mean(s, axis=0, keepdims=True) - s
    xc = jnp.matmul(xm.T, xm, precision=hp)
    xmt = jnp.mean(t, axis=0, keepdims=True) - t
    xct = jnp.matmul(xmt.T, xmt, precision=hp)
    diff = xc - xct
    loss = jnp.mean(diff * diff)
    return loss / (4.0 * d * d)


if __name__ == "__main__":
    key = jax.random.PRNGKey(0)
    k1, k2, k3, k4 = jax.random.split(key, 4)

    # Small demo shapes consistent with the module's 2-D (samples, features) inputs.
    source = jax.random.normal(k1, (8, 32), dtype=jnp.float32)
    target = 0.5 * jax.random.normal(k2, (16, 32), dtype=jnp.float32) + 0.1

    loss = jax.block_until_ready(coral_loss(source, target))
    ref = _coral_ref(source, target)
    assert jnp.allclose(loss, ref, rtol=1e-3, atol=1e-9), (float(loss), float(ref))

    # Second case exercising the tiled path: multiple feature tiles, multiple sample
    # chunks, and zero-padding of both axes.
    source2 = jax.random.normal(k3, (700, 384), dtype=jnp.float32)
    target2 = 0.5 * jax.random.normal(k4, (500, 384), dtype=jnp.float32) + 0.25

    loss2 = jax.block_until_ready(coral_loss(source2, target2))
    ref2 = _coral_ref(source2, target2)
    assert jnp.allclose(loss2, ref2, rtol=1e-3, atol=1e-9), (float(loss2), float(ref2))

    print("KERNEL_OK")
</pallas_src>

<mosaic_0001>
module attributes {stable_mosaic.version = 11 : i64} {
  func.func @_coral_kernel(%arg0: i32, %arg1: i32, %arg2: i32, %arg3: memref<24x32xf32, #tpu.memory_space<vmem>>, %arg4: memref<24x32xf32, #tpu.memory_space<vmem>>, %arg5: memref<24x1xf32, #tpu.memory_space<vmem>>, %arg6: memref<2x32xf32, #tpu.memory_space<vmem>>, %arg7: memref<2x32xf32, #tpu.memory_space<vmem>>, %arg8: memref<8x128xf32, #tpu.memory_space<vmem>>, %arg9: memref<32x32xf32, #tpu.memory_space<vmem>>) attributes {dimension_semantics = [#tpu.dimension_semantics<parallel>, #tpu.dimension_semantics<parallel>, #tpu.dimension_semantics<arbitrary>], iteration_bounds = array<i64: 1, 1, 1>, scalar_prefetch = 0 : i64, scratch_operands = 1 : i64, tpu.core_type = #tpu.core_type<tc>, window_params = [{transform_indices = @transform_0, window_bounds = array<i64: 24, 32>}, {transform_indices = @transform_1, window_bounds = array<i64: 24, 32>}, {transform_indices = @transform_2, window_bounds = array<i64: 24, 1>}, {transform_indices = @transform_3, window_bounds = array<i64: 2, 32>}, {transform_indices = @transform_4, window_bounds = array<i64: 2, 32>}, {transform_indices = @transform_5, window_bounds = array<i64: 8, 128>}]} {
    %c0_i32 = arith.constant 0 : i32
    %0 = arith.cmpi eq, %arg2, %c0_i32 : i32
    %1 = arith.extui %0 : i1 to i32
    %c0_i32_0 = arith.constant 0 : i32
    %2 = arith.cmpi ne, %1, %c0_i32_0 : i32
    scf.if %2 {
      %cst_12 = arith.constant 0.000000e+00 : f32
      %15 = vector.broadcast %cst_12 : f32 to vector<32x32xf32>
      %c0_13 = arith.constant 0 : index
      %c0_14 = arith.constant 0 : index
      %16 = vector.load %arg9[%c0_13, %c0_14] : memref<32x32xf32, #tpu.memory_space<vmem>>, vector<32x32xf32>
      tpu.vector_store %arg9[%c0_13, %c0_14], %15 {strides = array<i32>} : memref<32x32xf32, #tpu.memory_space<vmem>>, vector<32x32xf32>,
    } else {
    }
    %c0 = arith.constant 0 : index
    %c0_1 = arith.constant 0 : index
    %3 = vector.load %arg4[%c0, %c0_1] : memref<24x32xf32, #tpu.memory_space<vmem>>, vector<24x32xf32>
    %c0_2 = arith.constant 0 : index
    %c0_3 = arith.constant 0 : index
    %4 = vector.load %arg5[%c0_2, %c0_3] : memref<24x1xf32, #tpu.memory_space<vmem>>, vector<24x1xf32>
    %5 = vector.broadcast %4 : vector<24x1xf32> to vector<24x32xf32>
    %6 = arith.mulf %3, %5 : vector<24x32xf32>
    %c0_4 = arith.constant 0 : index
    %c0_5 = arith.constant 0 : index
    %7 = vector.load %arg9[%c0_4, %c0_5] : memref<32x32xf32, #tpu.memory_space<vmem>>, vector<32x32xf32>
    %c0_6 = arith.constant 0 : index
    %c0_7 = arith.constant 0 : index
    %8 = vector.load %arg3[%c0_6, %c0_7] : memref<24x32xf32, #tpu.memory_space<vmem>>, vector<24x32xf32>
    %cst = arith.constant dense<0.000000e+00> : vector<32x32xf32>
    %9 = tpu.matmul %8, %6, %cst {dimension_numbers = #tpu.dot_dimension_numbers<[0], [0], [1], [1], [0, 1, 1, 1], [], []>} : vector<24x32xf32>, vector<24x32xf32>, vector<32x32xf32> -> vector<32x32xf32>
    %10 = arith.addf %7, %9 : vector<32x32xf32>
    %c0_8 = arith.constant 0 : index
    %c0_9 = arith.constant 0 : index
    %11 = vector.load %arg9[%c0_8, %c0_9] : memref<32x32xf32, #tpu.memory_space<vmem>>, vector<32x32xf32>
    tpu.vector_store %arg9[%c0_8, %c0_9], %10 {strides = array<i32>} : memref<32x32xf32, #tpu.memory_space<vmem>>, vector<32x32xf32>,
    %c0_i32_10 = arith.constant 0 : i32
    %12 = arith.cmpi eq, %arg2, %c0_i32_10 : i32
    %13 = arith.extui %12 : i1 to i32
    %c0_i32_11 = arith.constant 0 : i32
    %14 = arith.cmpi ne, %13, %c0_i32_11 : i32
    scf.if %14 {
      %c0_12 = arith.constant 0 : index
      %c0_13 = arith.constant 0 : index
      %15 = vector.load %arg6[%c0_12, %c0_13] : memref<2x32xf32, #tpu.memory_space<vmem>>, vector<2x32xf32>
      %c0_14 = arith.constant 0 : index
      %c0_15 = arith.constant 0 : index
      %16 = vector.load %arg7[%c0_14, %c0_15] : memref<2x32xf32, #tpu.memory_space<vmem>>, vector<2x32xf32>
      %cst_16 = arith.constant dense<0.000000e+00> : vector<32x32xf32>
      %17 = tpu.matmul %15, %16, %cst_16 {dimension_numbers = #tpu.dot_dimension_numbers<[0], [0], [1], [1], [0, 1, 1, 1], [], []>} : vector<2x32xf32>, vector<2x32xf32>, vector<32x32xf32> -> vector<32x32xf32>
      %c0_17 = arith.constant 0 : index
      %c0_18 = arith.constant 0 : index
      %18 = vector.load %arg9[%c0_17, %c0_18] : memref<32x32xf32, #tpu.memory_space<vmem>>, vector<32x32xf32>
      %19 = arith.addf %18, %17 : vector<32x32xf32>
      %20 = arith.mulf %19, %19 : vector<32x32xf32>
      %21 = vector.shape_cast %20 : vector<32x32xf32> to vector<1x32x32xf32>
      %cst_19 = arith.constant dense<0.000000e+00> : vector<1xf32>
      %22 = vector.multi_reduction <add>, %21, %cst_19 [1, 2] : vector<1x32x32xf32> to vector<1xf32>
      %23 = vector.shape_cast %22 : vector<1xf32> to vector<1x1x1xf32>
      %24 = vector.extract %23[0, 0, 0] : f32 from vector<1x1x1xf32>
      %25 = vector.broadcast %24 : f32 to vector<8x128xf32>
      %c0_20 = arith.constant 0 : index
      %c0_21 = arith.constant 0 : index
      %26 = vector.load %arg8[%c0_20, %c0_21] : memref<8x128xf32, #tpu.memory_space<vmem>>, vector<8x128xf32>
      tpu.vector_store %arg8[%c0_20, %c0_21], %25 {strides = array<i32>} : memref<8x128xf32, #tpu.memory_space<vmem>>, vector<8x128xf32>,
    } else {
    }
    return
  }
  func.func @transform_0(%arg0: i32, %arg1: i32, %arg2: i32) -> (i32, i32) {
    %c0_i32 = arith.constant 0 : i32
    return %arg2, %arg0 : i32, i32
  }
  func.func @transform_1(%arg0: i32, %arg1: i32, %arg2: i32) -> (i32, i32) {
    %c0_i32 = arith.constant 0 : i32
    return %arg2, %arg1 : i32, i32
  }
  func.func @transform_2(%arg0: i32, %arg1: i32, %arg2: i32) -> (i32, i32) {
    %c0_i32 = arith.constant 0 : i32
    %c0_i32_0 = arith.constant 0 : i32
    return %arg2, %c0_i32 : i32, i32
  }
  func.func @transform_3(%arg0: i32, %arg1: i32, %arg2: i32) -> (i32, i32) {
    %c0_i32 = arith.constant 0 : i32
    %c0_i32_0 = arith.constant 0 : i32
    return %c0_i32, %arg0 : i32, i32
  }
  func.func @transform_4(%arg0: i32, %arg1: i32, %arg2: i32) -> (i32, i32) {
    %c0_i32 = arith.constant 0 : i32
    %c0_i32_0 = arith.constant 0 : i32
    return %c0_i32, %arg1 : i32, i32
  }
  func.func @transform_5(%arg0: i32, %arg1: i32, %arg2: i32) -> (i32, i32) {
    %c0_i32 = arith.constant 0 : i32
    return %arg0, %arg1 : i32, i32
  }
}

</mosaic_0001>

<llo_original>
// kernel: tpu_custom_call.1
$region0: #{tpu_custom_call.1}
  #allocation0 [shape = 'u32[]', space=smem, size = 0x4, offset = 0x4, fixed_abs, tag = 'smem constant byte address 0x4 - core index']
  #allocation1 [shape = 'u32[144,128]{1,0:T(1,128)}', space=vmem, size = 0x12000, scoped, tag = 'internal scratch']
  #allocation2 [shape = 'f32[32,32]{1,0:T(8,128)}', space=vmem, size = 0x4000, scoped, tag = 'scratch operand']
  %s0 = inlined_call_operand.vmem [shape: f32[24,32], index: 0, kind: input, shape index: {}]
  %s1 = inlined_call_operand.hbm [shape: f32[24,32], index: 1, kind: input, shape index: {}]
  %s2 = inlined_call_operand.vmem [shape: f32[24,1], index: 2, kind: input, shape index: {}]
  %s3 = inlined_call_operand.vmem [shape: f32[2,32], index: 3, kind: input, shape index: {}]
  %s4 = inlined_call_operand.vmem [shape: f32[2,32], index: 4, kind: input, shape index: {}]
  %s5 = inlined_call_operand.hbm [shape: f32[8,128], index: 5, kind: output, shape index: {}]
  %s6 = sld [smem:[#allocation0]]
  $region42: #{tpu_custom_call.1} parent=0
    _
  %s8 = ssub.s32 1, %s6
  %s9 = scalar_select 0, %s8, %s6
  $region1: #{tpu_custom_call.1} parent=0
    #allocation3 [shape = 'u8[12288]{0}', space=vmem, size = 0x3000, scoped, tag = 'input window, operand 1, single buffered']
    #allocation4 [shape = 's32[1]{0}', space=sflag, size = 0x4, scoped, tag = 'scoped memory for tpu_custom_call.1']
    #allocation5 [shape = 's32[1]{0}', space=sflag, size = 0x4, scoped, tag = 'scoped memory for tpu_custom_call.1']
    #allocation6 [shape = 'u8[4096]{0}', space=vmem, size = 0x1000, scoped, tag = 'output window, operand 0, single buffered']
    %10 = vsyncpa [#allocation4], 0
    %11 = vsyncpa [#allocation5], 0
    // Predicated region
    $region2: #{tpu_custom_call.1} parent=1 // pred_check
      _
    $region3: #{tpu_custom_call.1} parent=1 // pred_check_branch
      %13 = sbr.rel (0) target = $region5
    $region4: #{tpu_custom_call.1} parent=1 // pred_region
      _
    $region5: #{tpu_custom_call.1} parent=1 // pred_fallthru
      _
    // Predicated region
    $region6: #{tpu_custom_call.1} parent=1 // pred_check
      _
    $region7: #{tpu_custom_call.1} parent=1 // pred_check_branch
      %15 = sbr.rel (0) target = $region9
    $region8: #{tpu_custom_call.1} parent=1 // pred_region
      %s17 = ssub.s32 384, 384
      %18 = vsyncadd [#allocation4], %s17
      %s19 = sshll.u32 [#allocation3], 4
      %s20 = int_to_ptr.vmem [resolvable:$true] %s19
      %25 = dma.hbm_to_vmem [thread:$0]  %s1, 384, %s20, [#allocation4], 128, 128, 8
    $region9: #{tpu_custom_call.1} parent=1 // pred_fallthru
      _
    // Predicated region
    $region10: #{tpu_custom_call.1} parent=1 // pred_check
      _
    $region11: #{tpu_custom_call.1} parent=1 // pred_check_branch
      %27 = sbr.rel (0) target = $region13
    $region12: #{tpu_custom_call.1} parent=1 // pred_region
      _
    $region13: #{tpu_custom_call.1} parent=1 // pred_fallthru
      _
    // Predicated region
    $region14: #{tpu_custom_call.1} parent=1 // pred_check
      _
    $region15: #{tpu_custom_call.1} parent=1 // pred_check_branch
      %29 = sbr.rel (0) target = $region17
    $region16: #{tpu_custom_call.1} parent=1 // pred_region
      _
    $region17: #{tpu_custom_call.1} parent=1 // pred_fallthru
      _
    // Predicated region
    $region18: #{tpu_custom_call.1} parent=1 // pred_check
      _
    $region19: #{tpu_custom_call.1} parent=1 // pred_check_branch
      %31 = sbr.rel (0) target = $region21
    $region20: #{tpu_custom_call.1} parent=1 // pred_region
      _
    $region21: #{tpu_custom_call.1} parent=1 // pred_fallthru
      _
    // Predicated region
    $region22: #{tpu_custom_call.1} parent=1 // pred_check
      _
    $region23: #{tpu_custom_call.1} parent=1 // pred_check_branch
      %33 = sbr.rel (0) target = $region25
    $region24: #{tpu_custom_call.1} parent=1 // pred_region
      %34 = dma.done [#allocation4], 384
    $region25: #{tpu_custom_call.1} parent=1 // pred_fallthru
      _
    %p35 = scmp.eq.s32.totalorder 0, 0
    // Predicated region
    $region26: #{tpu_custom_call.1} parent=1 // pred_check
      %p36 = pneg %p35
    $region27: #{tpu_custom_call.1} parent=1 // pred_check_branch
      %38 = sbr.rel (%p36) target = $region29
    $region28: #{tpu_custom_call.1} parent=1 // pred_region
      %vm39 = vcmask 261120
      %40 = vst.msk [vmem:[#allocation2] sm:$0xff] %vm39, 0.0
      %41 = vst.msk [vmem:[#allocation2 + $0x8] sm:$0xff] %vm39, 0.0
      %42 = vst.msk [vmem:[#allocation2 + $0x10] sm:$0xff] %vm39, 0.0
      %43 = vst.msk [vmem:[#allocation2 + $0x18] sm:$0xff] %vm39, 0.0
    $region29: #{tpu_custom_call.1} parent=1 // pred_fallthru
      _
    %v44 = vld [vmem:[#allocation3] sm:$0xff]
    %v45 = vld [vmem:[#allocation3 + $0x8] sm:$0xff]
    %v46 = vld [vmem:[#allocation3 + $0x10] sm:$0xff]
    %v47 = vld [vmem:[%s2] sm:$0xff]
    %v48 = vld [vmem:[%s2 + $0x8] sm:$0xff]
    %v49 = vld [vmem:[%s2 + $0x10] sm:$0xff]
    %51 = vset.pattern.permute.xlu0 0
    %52 = vperm.xlu0 %51, %v47
    %v53 = vpop.permute.xlu0 %52
    %56 = vset.pattern.permute.xlu0 0
    %57 = vperm.xlu0 %56, %v48
    %v58 = vpop.permute.xlu0 %57
    %61 = vset.pattern.permute.xlu0 0
    %62 = vperm.xlu0 %61, %v49
    %v63 = vpop.permute.xlu0 %62
    %v65 = vmul.f32 %v44, %v53
    %v66 = vmul.f32 %v45, %v58
    %v67 = vmul.f32 %v46, %v63
    %v68 = vld [vmem:[#allocation2] sm:$0xff]
    %v69 = vld [vmem:[#allocation2 + $0x8] sm:$0xff]
    %v70 = vld [vmem:[#allocation2 + $0x10] sm:$0xff]
    %v71 = vld [vmem:[#allocation2 + $0x18] sm:$0xff]
    %v72 = vld [vmem:[%s0] sm:$0xff]
    %v73 = vld [vmem:[%s0 + $0x8] sm:$0xff]
    %v74 = vld [vmem:[%s0 + $0x10] sm:$0xff]
    %75 = vxpose.xlu0.b32.start [1/16] %v72, 128
    %76 = vxpose.xlu0.b32.cont [2/16] %v73, 128
    %77 = vxpose.xlu0.b32.cont [3/16] %v74, 128
    %78 = vxpose.xlu0.b32.cont [4/16] 0.0, 128
    %79 = vxpose.xlu0.b32.cont [5/16] 0.0, 128
    %80 = vxpose.xlu0.b32.cont [6/16] 0.0, 128
    %81 = vxpose.xlu0.b32.cont [7/16] 0.0, 128
    %82 = vxpose.xlu0.b32.cont [8/16] 0.0, 128
    %83 = vxpose.xlu0.b32.cont [9/16] 0.0, 128
    %84 = vxpose.xlu0.b32.cont [10/16] 0.0, 128
    %85 = vxpose.xlu0.b32.cont [11/16] 0.0, 128
    %86 = vxpose.xlu0.b32.cont [12/16] 0.0, 128
    %87 = vxpose.xlu0.b32.cont [13/16] 0.0, 128
    %88 = vxpose.xlu0.b32.cont [14/16] 0.0, 128
    %89 = vxpose.xlu0.b32.cont [15/16] 0.0, 128
    %90 = vxpose.xlu0.b32.end [16/16] 0.0, 128
    %v91 = vpop.trf.xlu0
    %v92 = vpop.trf.xlu0
    %v93 = vpop.trf.xlu0
    %v94 = vpop.trf.xlu0
    %v95 = vpop.trf.xlu0
    %v96 = vpop.trf.xlu0
    %v97 = vpop.trf.xlu0
    %v98 = vpop.trf.xlu0
    %v99 = vpop.trf.xlu0
    %v100 = vpop.trf.xlu0
    %v101 = vpop.trf.xlu0
    %v102 = vpop.trf.xlu0
    %v103 = vpop.trf.xlu0
    %v104 = vpop.trf.xlu0
    %v105 = vpop.trf.xlu0
    %v106 = vpop.trf.xlu0
    %vm107 = vcmask 195584
    %v109 = vsel %vm107, %v91, 0
    %v112 = vsel %vm107, %v92, 0
    %v115 = vsel %vm107, %v93, 0
    %v118 = vsel %vm107, %v94, 0
    %120 = vmatprep.subr.mxu0 0.0
    %121 = vmatpush1.msra.mxu0 %v65
    %122 = vmatprep.subr.mxu0 0.0
    %123 = vmatpush1.msra.mxu0 %v66
    %124 = vmatprep.subr.mxu0 0.0
    %125 = vmatpush1.msra.mxu0 %v67
    %126 = vmatprep.subr.mxu0 0.0
    %127 = vmatpush1.msra.mxu0 0.0
    %128 = vmatprep.subr.mxu0 0.0
    %129 = vmatpush1.msra.mxu0 0.0
    %130 = vmatprep.subr.mxu0 0.0
    %131 = vmatpush1.msra.mxu0 0.0
    %132 = vmatprep.subr.mxu0 0.0
    %133 = vmatpush1.msra.mxu0 0.0
    %134 = vmatprep.subr.mxu0 0.0
    %135 = vmatpush1.msra.mxu0 0.0
    %136 = vmatprep.subr.mxu0 0.0
    %137 = vmatpush1.msra.mxu0 0.0
    %138 = vmatprep.subr.mxu0 0.0
    %139 = vmatpush1.msra.mxu0 0.0
    %140 = vmatprep.subr.mxu0 0.0
    %141 = vmatpush1.msra.mxu0 0.0
    %142 = vmatprep.subr.mxu0 0.0
    %143 = vmatpush1.msra.mxu0 0.0
    %144 = vmatprep.subr.mxu0 0.0
    %145 = vmatpush1.msra.mxu0 0.0
    %146 = vmatprep.subr.mxu0 0.0
    %147 = vmatpush1.msra.mxu0 0.0
    %148 = vmatprep.subr.mxu0 0.0
    %149 = vmatpush1.msra.mxu0 0.0
    %150 = vmatprep.subr.mxu0 0.0
    %151 = vmatpush1.msra.mxu0 0.0
    %152 = vmatprep.subr.mxu0 0.0
    %153 = vmatpush1.msra.mxu0 0.0
    %154 = vmatprep.subr.mxu0 0.0
    %155 = vmatpush1.msra.mxu0 0.0
    %156 = vmatprep.subr.mxu0 0.0
    %157 = vmatpush1.msra.mxu0 0.0
    %158 = vmatprep.subr.mxu0 0.0
    %159 = vmatpush1.msra.mxu0 0.0
    %160 = vmatprep.subr.mxu0 0.0
    %161 = vmatpush1.msra.mxu0 0.0
    %162 = vmatprep.subr.mxu0 0.0
    %163 = vmatpush1.msra.mxu0 0.0
    %164 = vmatprep.subr.mxu0 0.0
    %165 = vmatpush1.msra.mxu0 0.0
    %166 = vmatprep.subr.mxu0 0.0
    %167 = vmatpush1.msra.mxu0 0.0
    %168 = vmatprep.subr.mxu0 0.0
    %169 = vmatpush1.msra.mxu0 0.0
    %170 = vmatprep.subr.mxu0 0.0
    %171 = vmatpush1.msra.mxu0 0.0
    %172 = vmatprep.subr.mxu0 0.0
    %173 = vmatpush1.msra.mxu0 0.0
    %174 = vmatprep.subr.mxu0 0.0
    %175 = vmatpush1.msra.mxu0 0.0
    %176 = vmatprep.subr.mxu0 0.0
    %177 = vmatpush1.msra.mxu0 0.0
    %178 = vmatprep.subr.mxu0 0.0
    %179 = vmatpush1.msra.mxu0 0.0
    %180 = vmatprep.subr.mxu0 0.0
    %181 = vmatpush1.msra.mxu0 0.0
    %182 = vmatprep.subr.mxu0 0.0
    %183 = vmatpush1.msra.mxu0 0.0
    %184 = vmatprep.mubr.f32.mxu0 0.0
    %185 = vmatmul.mubr.f32.gmra.mrb[0].mxu0 %v109
    %v186 = vpop.f32.mrb[0].mxu0
    %v187 = vadd.f32 0.0, %v186
    %v188 = vpop.f32.mrb[0].mxu0
    %189 = vmatprep.mubr.f32.mxu0 0.0
    %190 = vmatmul.mubr.f32.gmra.mrb[0].mxu0 %v112
    %v191 = vpop.f32.mrb[0].mxu0
    %v192 = vadd.f32 0.0, %v191
    %v193 = vpop.f32.mrb[0].mxu0
    %194 = vmatprep.mubr.f32.mxu0 0.0
    %195 = vmatmul.mubr.f32.gmra.mrb[0].mxu0 %v115
    %v196 = vpop.f32.mrb[0].mxu0
    %v197 = vadd.f32 0.0, %v196
    %v198 = vpop.f32.mrb[0].mxu0
    %199 = vmatprep.mubr.f32.mxu0 0.0
    %200 = vmatmul.mubr.f32.gmra.mrb[0].mxu0 %v118
    %v201 = vpop.f32.mrb[0].mxu0
    %v202 = vadd.f32 0.0, %v201
    %v203 = vpop.f32.mrb[0].mxu0
    %204 = vdwg.mxu0
    %v205 = vadd.f32 %v68, %v187
    %v206 = vadd.f32 %v69, %v192
    %v207 = vadd.f32 %v70, %v197
    %v208 = vadd.f32 %v71, %v202
    %vm209 = vcmask 261120
    %210 = vst.msk [vmem:[#allocation2] sm:$0xff] %vm209, %v205
    %211 = vst.msk [vmem:[#allocation2 + $0x8] sm:$0xff] %vm209, %v206
    %212 = vst.msk [vmem:[#allocation2 + $0x10] sm:$0xff] %vm209, %v207
    %213 = vst.msk [vmem:[#allocation2 + $0x18] sm:$0xff] %vm209, %v208
    // Predicated region
    $region30: #{tpu_custom_call.1} parent=1 // pred_check
      %p214 = pneg %p35
    $region31: #{tpu_custom_call.1} parent=1 // pred_check_branch
      %216 = sbr.rel (%p214) target = $region33
    $region32: #{tpu_custom_call.1} parent=1 // pred_region
      %v217 = vld [vmem:[%s3] sm:$0x3]
      %v218 = vld [vmem:[%s4] sm:$0x3]
      %219 = vxpose.xlu0.b32.start [1/16] %v217, 128
      %220 = vxpose.xlu0.b32.cont [2/16] 0.0, 128
      %221 = vxpose.xlu0.b32.cont [3/16] 0.0, 128
      %222 = vxpose.xlu0.b32.cont [4/16] 0.0, 128
      %223 = vxpose.xlu0.b32.cont [5/16] 0.0, 128
      %224 = vxpose.xlu0.b32.cont [6/16] 0.0, 128
      %225 = vxpose.xlu0.b32.cont [7/16] 0.0, 128
      %226 = vxpose.xlu0.b32.cont [8/16] 0.0, 128
      %227 = vxpose.xlu0.b32.cont [9/16] 0.0, 128
      %228 = vxpose.xlu0.b32.cont [10/16] 0.0, 128
      %229 = vxpose.xlu0.b32.cont [11/16] 0.0, 128
      %230 = vxpose.xlu0.b32.cont [12/16] 0.0, 128
      %231 = vxpose.xlu0.b32.cont [13/16] 0.0, 128
      %232 = vxpose.xlu0.b32.cont [14/16] 0.0, 128
      %233 = vxpose.xlu0.b32.cont [15/16] 0.0, 128
      %234 = vxpose.xlu0.b32.end [16/16] 0.0, 128
      %v235 = vpop.trf.xlu0
      %v236 = vpop.trf.xlu0
      %v237 = vpop.trf.xlu0
      %v238 = vpop.trf.xlu0
      %v239 = vpop.trf.xlu0
      %v240 = vpop.trf.xlu0
      %v241 = vpop.trf.xlu0
      %v242 = vpop.trf.xlu0
      %v243 = vpop.trf.xlu0
      %v244 = vpop.trf.xlu0
      %v245 = vpop.trf.xlu0
      %v246 = vpop.trf.xlu0
      %v247 = vpop.trf.xlu0
      %v248 = vpop.trf.xlu0
      %v249 = vpop.trf.xlu0
      %v250 = vpop.trf.xlu0
      %vm251 = vcmask 15360
      %v253 = vsel %vm251, %v235, 0
      %v256 = vsel %vm251, %v236, 0
      %v259 = vsel %vm251, %v237, 0
      %v262 = vsel %vm251, %v238, 0
      %vm264 = vcmask 1041408
      %v266 = vsel %vm264, %v218, 0
      %268 = vmatprep.subr.mxu0 0.0
      %269 = vmatpush1.msra.mxu0 %v266
      %270 = vmatprep.subr.mxu0 0.0
      %271 = vmatpush1.msra.mxu0 0.0
      %272 = vmatprep.subr.mxu0 0.0
      %273 = vmatpush1.msra.mxu0 0.0
      %274 = vmatprep.subr.mxu0 0.0
      %275 = vmatpush1.msra.mxu0 0.0
      %276 = vmatprep.subr.mxu0 0.0
      %277 = vmatpush1.msra.mxu0 0.0
      %278 = vmatprep.subr.mxu0 0.0
      %279 = vmatpush1.msra.mxu0 0.0
      %280 = vmatprep.subr.mxu0 0.0
      %281 = vmatpush1.msra.mxu0 0.0
      %282 = vmatprep.subr.mxu0 0.0
      %283 = vmatpush1.msra.mxu0 0.0
      %284 = vmatprep.subr.mxu0 0.0
      %285 = vmatpush1.msra.mxu0 0.0
      %286 = vmatprep.subr.mxu0 0.0
      %287 = vmatpush1.msra.mxu0 0.0
      %288 = vmatprep.subr.mxu0 0.0
      %289 = vmatpush1.msra.mxu0 0.0
      %290 = vmatprep.subr.mxu0 0.0
      %291 = vmatpush1.msra.mxu0 0.0
      %292 = vmatprep.subr.mxu0 0.0
      %293 = vmatpush1.msra.mxu0 0.0
      %294 = vmatprep.subr.mxu0 0.0
      %295 = vmatpush1.msra.mxu0 0.0
      %296 = vmatprep.subr.mxu0 0.0
      %297 = vmatpush1.msra.mxu0 0.0
      %298 = vmatprep.subr.mxu0 0.0
      %299 = vmatpush1.msra.mxu0 0.0
      %300 = vmatprep.subr.mxu0 0.0
      %301 = vmatpush1.msra.mxu0 0.0
      %302 = vmatprep.subr.mxu0 0.0
      %303 = vmatpush1.msra.mxu0 0.0
      %304 = vmatprep.subr.mxu0 0.0
      %305 = vmatpush1.msra.mxu0 0.0
      %306 = vmatprep.subr.mxu0 0.0
      %307 = vmatpush1.msra.mxu0 0.0
      %308 = vmatprep.subr.mxu0 0.0
      %309 = vmatpush1.msra.mxu0 0.0
      %310 = vmatprep.subr.mxu0 0.0
      %311 = vmatpush1.msra.mxu0 0.0
      %312 = vmatprep.subr.mxu0 0.0
      %313 = vmatpush1.msra.mxu0 0.0
      %314 = vmatprep.subr.mxu0 0.0
      %315 = vmatpush1.msra.mxu0 0.0
      %316 = vmatprep.subr.mxu0 0.0
      %317 = vmatpush1.msra.mxu0 0.0
      %318 = vmatprep.subr.mxu0 0.0
      %319 = vmatpush1.msra.mxu0 0.0
      %320 = vmatprep.subr.mxu0 0.0
      %321 = vmatpush1.msra.mxu0 0.0
      %322 = vmatprep.subr.mxu0 0.0
      %323 = vmatpush1.msra.mxu0 0.0
      %324 = vmatprep.subr.mxu0 0.0
      %325 = vmatpush1.msra.mxu0 0.0
      %326 = vmatprep.subr.mxu0 0.0
      %327 = vmatpush1.msra.mxu0 0.0
      %328 = vmatprep.subr.mxu0 0.0
      %329 = vmatpush1.msra.mxu0 0.0
      %330 = vmatprep.subr.mxu0 0.0
      %331 = vmatpush1.msra.mxu0 0.0
      %332 = vmatprep.mubr.f32.mxu0 0.0
      %333 = vmatmul.mubr.f32.gmra.mrb[0].mxu0 %v253
      %v334 = vpop.f32.mrb[0].mxu0
      %v335 = vadd.f32 0.0, %v334
      %v336 = vpop.f32.mrb[0].mxu0
      %337 = vmatprep.mubr.f32.mxu0 0.0
      %338 = vmatmul.mubr.f32.gmra.mrb[0].mxu0 %v256
      %v339 = vpop.f32.mrb[0].mxu0
      %v340 = vadd.f32 0.0, %v339
      %v341 = vpop.f32.mrb[0].mxu0
      %342 = vmatprep.mubr.f32.mxu0 0.0
      %343 = vmatmul.mubr.f32.gmra.mrb[0].mxu0 %v259
      %v344 = vpop.f32.mrb[0].mxu0
      %v345 = vadd.f32 0.0, %v344
      %v346 = vpop.f32.mrb[0].mxu0
      %347 = vmatprep.mubr.f32.mxu0 0.0
      %348 = vmatmul.mubr.f32.gmra.mrb[0].mxu0 %v262
      %v349 = vpop.f32.mrb[0].mxu0
      %v350 = vadd.f32 0.0, %v349
      %v351 = vpop.f32.mrb[0].mxu0
      %352 = vdwg.mxu0
      %v353 = vld [vmem:[#allocation2] sm:$0xff]
      %v354 = vld [vmem:[#allocation2 + $0x8] sm:$0xff]
      %v355 = vld [vmem:[#allocation2 + $0x10] sm:$0xff]
      %v356 = vld [vmem:[#allocation2 + $0x18] sm:$0xff]
      %v357 = vadd.f32 %v353, %v335
      %v358 = vadd.f32 %v354, %v340
      %v359 = vadd.f32 %v355, %v345
      %v360 = vadd.f32 %v356, %v350
      %v361 = vmul.f32 %v357, %v357
      %v362 = vmul.f32 %v358, %v358
      %v363 = vmul.f32 %v359, %v359
      %v364 = vmul.f32 %v360, %v360
      %v365 = vsel %vm209, %v361, 0.0
      %v366 = vsel %vm209, %v362, 0.0
      %v367 = vadd.f32 %v365, %v366
      %v368 = vsel %vm209, %v363, 0.0
      %v369 = vadd.f32 %v367, %v368
      %v370 = vsel %vm209, %v364, 0.0
      %v371 = vadd.f32 %v369, %v370
      %372 = vadd.xlane.f32.xlu0 %v371
      %v373 = vpop.xlane.xlu0 %372
      %v374 = vrot.slane %v373, 4
      %v375 = vadd.f32 %v373, %v374
      %v376 = vrot.slane %v375, 2
      %v377 = vadd.f32 %v375, %v376
      %v378 = vrot.slane %v377, 1
      %v379 = vadd.f32 %v377, %v378
      %s380 = vtos %v379
      %v381 = vstv %s380
      %382 = vst [vmem:[#allocation6] sm:$0xff] %v381
    $region33: #{tpu_custom_call.1} parent=1 // pred_fallthru
      _
    // Predicated region
    $region34: #{tpu_custom_call.1} parent=1 // pred_check
      _
    $region35: #{tpu_custom_call.1} parent=1 // pred_check_branch
      %384 = sbr.rel (0) target = $region37
    $region36: #{tpu_custom_call.1} parent=1 // pred_region
      %s386 = ssub.s32 128, 128
      %387 = vsyncadd [#allocation5], %s386
      %s389 = sshll.u32 [#allocation6], 4
      %s390 = int_to_ptr.vmem [resolvable:$true] %s389
      %392 = dma.vmem_to_hbm [thread:$0]  %s390, 128, %s5, [#allocation5]
    $region37: #{tpu_custom_call.1} parent=1 // pred_fallthru
      _
    // Predicated region
    $region38: #{tpu_custom_call.1} parent=1 // pred_check
      _
    $region39: #{tpu_custom_call.1} parent=1 // pred_check_branch
      %394 = sbr.rel (0) target = $region41
    $region40: #{tpu_custom_call.1} parent=1 // pred_region
      %395 = dma.done [#allocation5], 128
    $region41: #{tpu_custom_call.1} parent=1 // pred_fallthru
      _
    %396 = vsyncpa [#allocation4], 1
    %397 = vsyncpa [#allocation5], 1

</llo_original>
